<compile_context>
chip_gen: v6e
topology: v6e:2x2x1
jax: 0.10.0
libtpu: 0.0.40
codegen_flags: <defaults>
</compile_context>

<pallas_src>
import numpy as np
import jax
import jax.numpy as jnp
from jax.experimental import pallas as pl
from jax.experimental.pallas import tpu as pltpu


def _flatten_dma_kernel(x_hbm, o_hbm, sem):
    # Single whole-array HBM -> HBM DMA copy: no VMEM round-trip, no vld/vst
    # vreg traffic, no per-tile pipeline overhead.
    cp = pltpu.make_async_copy(x_hbm, o_hbm, sem)
    cp.start()
    cp.wait()


def flatten_forward(x, materialize: bool = True):
    """Pallas equivalent of torch.flatten(x, 1) for an NCHW (or any >=2-D) input.

    materialize=False returns the metadata-only reshape (zero HBM traffic);
    materialize=True writes a fresh (N, F) HBM buffer via a single Pallas DMA.
    """
    n = x.shape[0]
    f = int(np.prod(x.shape[1:]))

    # Glue: row-major collapse of all non-batch dims (metadata-only in XLA).
    x2 = jnp.reshape(x, (n, f))

    if not materialize:
        # Fastest correct flatten: no copy at all.
        return x2

    return pl.pallas_call(
        _flatten_dma_kernel,
        out_shape=jax.ShapeDtypeStruct((n, f), x.dtype),
        # Raw HBM refs on both sides; the kernel does the data movement itself.
        in_specs=[pl.BlockSpec(memory_space=pl.ANY)],
        out_specs=pl.BlockSpec(memory_space=pl.ANY),
        scratch_shapes=[pltpu.SemaphoreType.DMA],
    )(x2)


if __name__ == "__main__":
    key = jax.random.PRNGKey(0)
    # Small NCHW input consistent with a classifier feature map.
    x = jax.random.normal(key, (2, 4, 16, 16), dtype=jnp.float32)

    y = flatten_forward(x)          # exercises the Pallas DMA kernel
    y = jax.block_until_ready(y)

    # Reference check against plain JAX (== torch.flatten(x, 1) semantics).
    y_ref = jnp.reshape(x, (x.shape[0], -1))
    assert y.shape == (2, 4 * 16 * 16), y.shape
    assert y.dtype == x.dtype
    np.testing.assert_array_equal(np.asarray(y), np.asarray(y_ref))

    # Also check the copy-free path.
    y_fast = jax.block_until_ready(flatten_forward(x, materialize=False))
    np.testing.assert_array_equal(np.asarray(y_fast), np.asarray(y_ref))

    print("KERNEL_OK")
</pallas_src>

<mosaic_0001>
module attributes {stable_mosaic.version = 11 : i64} {
  func.func @_flatten_dma_kernel(%arg0: memref<2x1024xf32, #tpu.memory_space<any>>, %arg1: memref<2x1024xf32, #tpu.memory_space<any>>, %arg2: memref<!tpu.dma_semaphore, #tpu.memory_space<semaphore_mem>>) attributes {dimension_semantics = [], scalar_prefetch = 0 : i64, scratch_operands = 1 : i64, tpu.core_type = #tpu.core_type<tc>} {
    tpu.enqueue_dma source(%arg0 : memref<2x1024xf32, #tpu.memory_space<any>>) target(%arg1 : memref<2x1024xf32, #tpu.memory_space<any>>) target_semaphore(%arg2 : memref<!tpu.dma_semaphore, #tpu.memory_space<semaphore_mem>>)
    tpu.wait_dma2 semaphore(%arg2 : memref<!tpu.dma_semaphore, #tpu.memory_space<semaphore_mem>>) src(%arg0 : memref<2x1024xf32, #tpu.memory_space<any>>) dst(%arg1 : memref<2x1024xf32, #tpu.memory_space<any>>)
    return
  }
}

</mosaic_0001>

<llo_original>
// kernel: tpu_custom_call.1
$region0: #{tpu_custom_call.1}
  #allocation0 [shape = 'u32[]', space=smem, size = 0x4, offset = 0x4, fixed_abs, tag = 'smem constant byte address 0x4 - core index']
  #allocation1 [shape = 'u32[144,128]{1,0:T(1,128)}', space=vmem, size = 0x12000, scoped, tag = 'internal scratch']
  #allocation2 [shape = 's32[1]{0}', space=sflag, size = 0x4, scoped, tag = 'scratch operand']
  #allocation3 [shape = 's32[]', space=sflag, size = 0x4, offset = 0, fixed_abs, tag = 'sflag constant byte address 0x0 - dummy sync flag']
  #allocation4 [shape = 'u32[0]{0}', space=smem, size = 0, offset = 0, fixed_abs, tag = 'smem constant byte address 0x0 - null']
  %s0 = inlined_call_operand.hbm [shape: f32[2,1024], index: 0, kind: input, shape index: {}]
  %s1 = inlined_call_operand.hbm [shape: f32[2,1024], index: 1, kind: output, shape index: {}]
  %s2 = sld [smem:[#allocation0]]
  $region2: #{tpu_custom_call.1} parent=0
    _
  %s4 = ssub.s32 1, %s2
  %s5 = scalar_select 0, %s4, %s2
  %s7 = sshll.u32 1, 14
  %s8 = sxor.u32 4294967295, %s7
  %12 = dma.general %s0, 256, %s1, [#allocation2], 131072, [#allocation4], 0, 0
  %s13 = smul.u32 2, 1
  %s14 = smul.u32 %s13, 8
  %s15 = sshll.u32 %s14, 4
  %16 = dma.done [#allocation2], %s15
  %17 = vsyncmov [#allocation2]
  %s18 = vpop.sfrf %17
  %p19 = scmp.eq.s32.totalorder %s18, 0
  %p20 = pneg %p19
  %22 = shalt.err (%p20)

</llo_original>
